<compile_context>
chip_gen: v7x
topology: tpu7x:2x2x1
jax: 0.10.0
libtpu: 0.0.40
codegen_flags: <defaults>
</compile_context>

<pallas_src>
import functools

import jax
import jax.numpy as jnp
from jax.experimental import pallas as pl
from jax.experimental.pallas import tpu as pltpu


def _round_up(x, m):
    return (x + m - 1) // m * m


# ------------------------------------------------------------------
# Tiled matmul (+ optional bias) — bf16 operands, f32 accumulation
# directly into the resident output block (no VMEM scratch).
# ------------------------------------------------------------------
def _matmul_kernel(x_ref, w_ref, o_ref):
    @pl.when(pl.program_id(2) == 0)
    def _():
        o_ref[...] = jnp.zeros_like(o_ref)

    o_ref[...] += jnp.dot(x_ref[...], w_ref[...],
                          preferred_element_type=jnp.float32)


def _matmul_bias_kernel(x_ref, w_ref, b_ref, o_ref):
    @pl.when(pl.program_id(2) == 0)
    def _():
        o_ref[...] = jnp.zeros_like(o_ref)

    o_ref[...] += jnp.dot(x_ref[...], w_ref[...],
                          preferred_element_type=jnp.float32)

    @pl.when(pl.program_id(2) == pl.num_programs(2) - 1)
    def _():
        o_ref[...] += b_ref[...]


def _matmul_vmem_budget(tm, tn, tk, has_bias):
    # Double-buffered bf16 operand tiles + (conservatively) double-buffered
    # f32 output tile.  Honest budget (footprint + headroom), capped well
    # under v7x's 64 MiB physical VMEM; v5e/v6e have plenty of slack anyway.
    footprint = 2 * tm * tk * 2 + 2 * tk * tn * 2 + 2 * tm * tn * 4
    if has_bias:
        footprint += 2 * tn * 4
    return int(min(footprint + (8 << 20), 32 << 20))


def matmul_bias(x, w, b=None, *, tm=1024, tn=256, tk=1024):
    """x: [M, K], w: [K, N], optional b: [N] -> [M, N] float32.

    Operands are cast to bf16 (MXU-native; no-op if already bf16),
    accumulation is f32.  M/K/N are padded to tile multiples (>=128 on the
    lane axes) so stores stay unmasked.  Large default tiles keep the K=1024
    predictor head at a single K step; they are clamped for small problems.
    NOTE: bf16 operands are a numeric divergence from the f32 PyTorch
    reference (standard mixed-precision practice).
    """
    M, K = x.shape
    K2, N = w.shape
    assert K == K2
    tm = min(tm, _round_up(M, 128))
    tn = min(tn, _round_up(N, 128))
    tk = min(tk, _round_up(K, 128))
    Mp, Kp, Np = _round_up(M, tm), _round_up(K, tk), _round_up(N, tn)

    xp = jnp.pad(x.astype(jnp.bfloat16), ((0, Mp - M), (0, Kp - K)))
    wp = jnp.pad(w.astype(jnp.bfloat16), ((0, Kp - K), (0, Np - N)))

    grid = (Mp // tm, Np // tn, Kp // tk)
    x_spec = pl.BlockSpec((tm, tk), lambda i, j, k: (i, k))
    w_spec = pl.BlockSpec((tk, tn), lambda i, j, k: (k, j))
    o_spec = pl.BlockSpec((tm, tn), lambda i, j, k: (i, j))
    cparams = pltpu.CompilerParams(
        dimension_semantics=("parallel", "parallel", "arbitrary"),
        vmem_limit_bytes=_matmul_vmem_budget(tm, tn, tk, b is not None))

    if b is None:
        out = pl.pallas_call(
            _matmul_kernel,
            out_shape=jax.ShapeDtypeStruct((Mp, Np), jnp.float32),
            grid=grid,
            in_specs=[x_spec, w_spec],
            out_specs=o_spec,
            compiler_params=cparams,
        )(xp, wp)
    else:
        bp = jnp.pad(b.astype(jnp.float32).reshape(1, N), ((0, 0), (0, Np - N)))
        out = pl.pallas_call(
            _matmul_bias_kernel,
            out_shape=jax.ShapeDtypeStruct((Mp, Np), jnp.float32),
            grid=grid,
            in_specs=[x_spec, w_spec, pl.BlockSpec((1, tn), lambda i, j, k: (0, j))],
            out_specs=o_spec,
            compiler_params=cparams,
        )(xp, wp, bp)
    return out[:M, :N]


# ------------------------------------------------------------------
# conv1: Conv2d(num_channels, 64, kernel=7, stride=2, padding=3, bias=False)
# Default path lowers through XLA's conv emitter (no im2col HBM blow-up,
# full MXU column utilization).  A Pallas bf16 im2col + matmul fallback is
# kept for parity checks.
# ------------------------------------------------------------------
def conv1_7x7_s2(x_nchw, w_oc_c_kh_kw, *, impl="xla"):
    if impl == "xla":
        # bf16 operands, f32 accumulation — matches the Pallas matmul's
        # numerics; reads the input exactly once (no 49x patch matrix).
        return jax.lax.conv_general_dilated(
            x_nchw.astype(jnp.bfloat16),
            w_oc_c_kh_kw.astype(jnp.bfloat16),
            window_strides=(2, 2),
            padding=((3, 3), (3, 3)),
            dimension_numbers=("NCHW", "OIHW", "NCHW"),
            preferred_element_type=jnp.float32)

    # Pallas fallback: bf16 im2col + tiled Pallas matmul.  Patches are built
    # in bf16 BEFORE materialization (halves HBM traffic vs. the previous f32
    # build).
    # TODO(synk): at production image sizes move the 7x7/stride-2 patch gather
    # inside the Pallas kernel (phase-decimated input + in-VMEM patch build)
    # to remove the residual ~49x bf16 im2col traffic; the XLA path above is
    # the recommended production lowering.
    B, C, H, W = x_nchw.shape
    OC = w_oc_c_kh_kw.shape[0]
    KH = KW = 7
    S, P = 2, 3
    xb = x_nchw.astype(jnp.bfloat16)
    xp = jnp.pad(xb, ((0, 0), (0, 0), (P, P), (P, P)))
    OH = (H + 2 * P - KH) // S + 1
    OW = (W + 2 * P - KW) // S + 1
    patches = []
    for kh in range(KH):
        for kw in range(KW):
            patches.append(xp[:, :, kh:kh + S * OH:S, kw:kw + S * OW:S])
    pat = jnp.stack(patches, axis=2)                        # [B, C, 49, OH, OW] bf16
    pat = pat.transpose(0, 3, 4, 1, 2).reshape(B * OH * OW, C * KH * KW)
    wmat = w_oc_c_kh_kw.astype(jnp.bfloat16).reshape(OC, C * KH * KW).T
    out = matmul_bias(pat, wmat)                            # [B*OH*OW, OC] f32
    return out.reshape(B, OH, OW, OC).transpose(0, 3, 1, 2)  # NCHW


# ------------------------------------------------------------------
# Matcher + "softer labels" assignment, tiled over the anchor axis.
# ------------------------------------------------------------------
def _iou(gt, anchors_t):
    """gt: [G, >=4] xyxy (cols 0..3), anchors_t: [4, TA] xyxy -> IoU [G, TA]."""
    ax1, ay1 = anchors_t[0:1, :], anchors_t[1:2, :]
    ax2, ay2 = anchors_t[2:3, :], anchors_t[3:4, :]
    gx1, gy1 = gt[:, 0:1], gt[:, 1:2]
    gx2, gy2 = gt[:, 2:3], gt[:, 3:4]
    area_a = (ax2 - ax1) * (ay2 - ay1)                   # [1, TA]
    area_g = (gx2 - gx1) * (gy2 - gy1)                   # [G, 1]
    iw = jnp.maximum(jnp.minimum(gx2, ax2) - jnp.maximum(gx1, ax1), 0.0)
    ih = jnp.maximum(jnp.minimum(gy2, ay2) - jnp.maximum(gy1, ay1), 0.0)
    inter = iw * ih
    union = area_g + area_a - inter
    # eps guards degenerate (zero-area) boxes against NaN (torchvision would
    # propagate NaN); the identical formula is used in both passes so
    # equality comparisons stay consistent.
    return inter / jnp.maximum(union, 1e-9)


def _gt_best_iou_kernel(anchors_t_ref, gt_ref, best_ref):
    """Pass 1: per-gt max IoU over this anchor tile (partial maxima only).

    Each grid step writes its own (1, G, 1) block -> the grid axis is
    'parallel' (v7x's two TensorCores can split it); the final max over tiles
    is a tiny JAX reduction outside the kernel."""
    iou = _iou(gt_ref[...], anchors_t_ref[...])              # [G, TA]
    best_ref[...] = jnp.max(iou, axis=1, keepdims=True)[None]  # (1, G, 1)


def _match_label_kernel(high, low, allow_lowq, *refs):
    """Pass 2: Matcher + soft/class labels for one anchor tile.

    gt_ref columns: [x1, y1, x2, y2, score_label, confidence_label,
                     class_label, 0].
    """
    if allow_lowq:
        gt_best_ref, anchors_t_ref, gt_ref, soft_ref, cls_ref, idx_ref = refs
    else:
        anchors_t_ref, gt_ref, soft_ref, cls_ref, idx_ref = refs
        gt_best_ref = None

    G = gt_ref.shape[0]
    TA = anchors_t_ref.shape[1]

    iou = _iou(gt_ref[...], anchors_t_ref[...])                      # [G, TA]

    # --- torchvision Matcher ---
    matched_vals = jnp.max(iou, axis=0, keepdims=True)               # [1, TA]
    gt_iota = jax.lax.broadcasted_iota(jnp.int32, (G, TA), 0)
    is_max = iou >= matched_vals
    all_matches = jnp.min(jnp.where(is_max, gt_iota, jnp.int32(G)),
                          axis=0, keepdims=True)                     # [1, TA]
    below = matched_vals < low
    between_thr = (matched_vals >= low) & (matched_vals < high)
    matches = jnp.where(below, jnp.int32(-1),
                        jnp.where(between_thr, jnp.int32(-2), all_matches))
    if allow_lowq:
        # anchors tying some gt's global best IoU are restored to their argmax.
        lowq = jnp.max((iou >= gt_best_ref[...]).astype(jnp.float32),
                       axis=0, keepdims=True) > 0.0                  # [1, TA]
        matches = jnp.where(lowq, all_matches, matches)

    clamped = jnp.maximum(matches, 0)                                # [1, TA]
    onehot = clamped == gt_iota                                      # [G, TA] bool

    # Exact f32 gather of the matched gt's label attributes: masked sum over
    # G (exactly one nonzero term per anchor) -> no MXU bf16 rounding.
    def gather_col(col):
        return jnp.sum(jnp.where(onehot, gt_ref[:, col:col + 1], 0.0),
                       axis=0, keepdims=True)                        # [1, TA]

    g_score = gather_col(4)
    g_conf = gather_col(5)
    g_cls = gather_col(6)

    # Shared predicates (computed once, reused by both label rules).
    fg = matches >= 0
    bg = matches == -1                                   # BELOW_LOW_THRESHOLD
    between = matches == -2                              # BETWEEN_THRESHOLDS
    ignore_fg = fg & ((g_score < 1.0) | (g_conf == 0.0))
    discard = between | ignore_fg

    # RPN softer labels (float)
    soft = jnp.minimum(fg.astype(jnp.float32), g_score)
    soft = jnp.where(bg, 0.0, soft)
    soft = jnp.where(discard, -1.0, soft)

    # RoIHeads class labels (int)
    cls_lab = jnp.where(bg, 0.0, g_cls)
    cls_lab = jnp.where(discard, -1.0, cls_lab)

    soft_ref[...] = soft
    cls_ref[...] = cls_lab.astype(jnp.int32)
    idx_ref[...] = clamped


def _match_and_label(boxes, gt_boxes, score_labels, conf_labels, cls_labels,
                     *, high, low, allow_lowq, ta=8192):
    """boxes: [A,4], gt_*: [G]/[G,4].

    Returns (soft_labels [A] f32, class_labels [A] i32,
             clamped_matched_idxs [A] i32)."""
    A = boxes.shape[0]
    G = gt_boxes.shape[0]
    TA = min(ta, _round_up(A, 128))
    Ap = _round_up(A, TA)
    nt = Ap // TA

    anchors_t = jnp.pad(boxes.T.astype(jnp.float32), ((0, 0), (0, Ap - A)))  # [4, Ap]
    gtattr = jnp.zeros((G, 8), jnp.float32)
    gtattr = gtattr.at[:, 0:4].set(gt_boxes.astype(jnp.float32))
    gtattr = gtattr.at[:, 4].set(score_labels.astype(jnp.float32))
    gtattr = gtattr.at[:, 5].set(conf_labels.astype(jnp.float32))
    gtattr = gtattr.at[:, 6].set(cls_labels.astype(jnp.float32))

    grid = (nt,)
    inputs = [anchors_t, gtattr]
    in_specs = [pl.BlockSpec((4, TA), lambda i: (0, i)),
                pl.BlockSpec((G, 8), lambda i: (0, 0))]

    if allow_lowq:
        # Pass 1 (only needed for allow_low_quality_matches=True): per-tile
        # partial per-gt maxima on a 'parallel' grid; final max done outside.
        partial = pl.pallas_call(
            _gt_best_iou_kernel,
            out_shape=jax.ShapeDtypeStruct((nt, G, 1), jnp.float32),
            grid=grid,
            in_specs=[pl.BlockSpec((4, TA), lambda i: (0, i)),
                      pl.BlockSpec((G, 8), lambda i: (0, 0))],
            out_specs=pl.BlockSpec((1, G, 1), lambda i: (i, 0, 0)),
            compiler_params=pltpu.CompilerParams(
                dimension_semantics=("parallel",)),
        )(anchors_t, gtattr)
        gt_best = jnp.max(partial, axis=0)                           # [G, 1]
        inputs = [gt_best] + inputs
        in_specs = [pl.BlockSpec((G, 1), lambda i: (0, 0))] + in_specs

    # Pass 2: match + labels per anchor tile (independent tiles -> parallel).
    kernel = functools.partial(_match_label_kernel, high, low, allow_lowq)
    soft, cls_lab, idx = pl.pallas_call(
        kernel,
        out_shape=(
            jax.ShapeDtypeStruct((1, Ap), jnp.float32),
            jax.ShapeDtypeStruct((1, Ap), jnp.int32),
            jax.ShapeDtypeStruct((1, Ap), jnp.int32),
        ),
        grid=grid,
        in_specs=in_specs,
        out_specs=(
            pl.BlockSpec((1, TA), lambda i: (0, i)),
            pl.BlockSpec((1, TA), lambda i: (0, i)),
            pl.BlockSpec((1, TA), lambda i: (0, i)),
        ),
        compiler_params=pltpu.CompilerParams(
            dimension_semantics=("parallel",)),
    )(*inputs)

    return soft[0, :A], cls_lab[0, :A], idx[0, :A]


def assign_targets_to_anchors(anchors, gt_boxes, score_labels, confidence_labels):
    """RPN path: Matcher(0.7, 0.3, allow_low_quality_matches=True) + soft labels.
    Returns (labels [A] f32, matched_gt_boxes [A,4] f32)."""
    A = anchors.shape[0]
    if gt_boxes.shape[0] == 0:
        return jnp.zeros((A,), jnp.float32), jnp.zeros((A, 4), jnp.float32)
    G = gt_boxes.shape[0]
    soft, _, idx = _match_and_label(
        anchors, gt_boxes, score_labels, confidence_labels,
        jnp.zeros((G,), jnp.float32),
        high=0.7, low=0.3, allow_lowq=True)
    # Exact (f32) gather of matched gt boxes outside the kernel from the int32
    # argmax indices — avoids any MXU-precision perturbation of coordinates.
    matched_gt_boxes = jnp.take(gt_boxes.astype(jnp.float32), idx, axis=0)
    return soft, matched_gt_boxes


def assign_targets_to_proposals(proposals, gt_boxes, gt_labels, gt_confs, gt_scores):
    """RoIHeads path: Matcher(0.5, 0.5, allow_low_quality_matches=False).
    Returns (clamped_matched_idxs [P] i32, labels [P] i32)."""
    P = proposals.shape[0]
    if gt_boxes.shape[0] == 0:
        return jnp.zeros((P,), jnp.int32), jnp.zeros((P,), jnp.int32)
    _, cls_lab, clamped_idx = _match_and_label(
        proposals, gt_boxes, gt_scores, gt_confs, gt_labels,
        high=0.5, low=0.5, allow_lowq=False)
    return clamped_idx, cls_lab


# ------------------------------------------------------------------
# FastRCNNPredictor head: cls_score and bbox_pred fused into ONE matmul.
# ------------------------------------------------------------------
def fastrcnn_predictor(feats, w_cls, b_cls, w_bbox, b_bbox):
    n_cls = w_cls.shape[1]
    w = jnp.concatenate([w_cls, w_bbox], axis=1)
    b = jnp.concatenate([b_cls, b_bbox], axis=0)
    out = matmul_bias(feats, w, b)   # K=in_features fits a single tk=1024 step
    return out[:, :n_cls], out[:, n_cls:]


if __name__ == "__main__":
    key = jax.random.PRNGKey(0)
    k = iter(jax.random.split(key, 16))

    # --- small synthetic shapes consistent with the module ---
    B, num_channels, H, W = 2, 4, 16, 16
    num_classes = 3
    in_features = 32          # (1024 in the real resnet50 head; kept small here)
    A = 256                   # anchors
    G = 8                     # gt boxes
    P_props = 128             # proposals
    N_props = 8               # proposals through the box predictor head

    # conv1: Conv2d(num_channels, 64, 7, stride=2, padding=3, bias=False)
    x = jax.random.normal(next(k), (B, num_channels, H, W), jnp.float32)
    w_conv1 = 0.05 * jax.random.normal(next(k), (64, num_channels, 7, 7), jnp.float32)
    feat = conv1_7x7_s2(x, w_conv1, impl="xla")            # [2, 64, 8, 8] NCHW
    feat_pallas = conv1_7x7_s2(x, w_conv1, impl="pallas_im2col")
    assert bool(jnp.allclose(feat, feat_pallas, atol=5e-2, rtol=5e-2))

    # targets
    cxcy = jax.random.uniform(next(k), (A, 2), minval=2.0, maxval=14.0)
    wh = jax.random.uniform(next(k), (A, 2), minval=1.0, maxval=6.0)
    anchors = jnp.concatenate([cxcy - wh / 2, cxcy + wh / 2], axis=1)   # xyxy
    gcxcy = jax.random.uniform(next(k), (G, 2), minval=3.0, maxval=13.0)
    gwh = jax.random.uniform(next(k), (G, 2), minval=1.5, maxval=5.0)
    gt_boxes = jnp.concatenate([gcxcy - gwh / 2, gcxcy + gwh / 2], axis=1)
    score_labels = jax.random.choice(next(k), jnp.array([0.0, 0.5, 1.0]), (G,))
    confidence_labels = jax.random.choice(next(k), jnp.array([0.0, 1.0, 2.0]), (G,))
    gt_class_labels = jax.random.randint(next(k), (G,), 1, num_classes)

    # RPN softer-label anchor assignment
    labels, matched_gt_boxes = assign_targets_to_anchors(
        anchors, gt_boxes, score_labels, confidence_labels)

    # RoIHeads proposal assignment (same kernel, different Matcher params,
    # no pass-1 IoU sweep since allow_low_quality_matches=False)
    proposals = anchors[:P_props] + 0.25
    matched_idxs_p, prop_labels = assign_targets_to_proposals(
        proposals, gt_boxes, gt_class_labels, confidence_labels, score_labels)

    # FastRCNNPredictor head (fused cls_score + bbox_pred)
    box_feats = jax.random.normal(next(k), (N_props, in_features), jnp.float32)
    w_cls = 0.02 * jax.random.normal(next(k), (in_features, num_classes), jnp.float32)
    b_cls = jnp.zeros((num_classes,), jnp.float32)
    w_bbox = 0.02 * jax.random.normal(next(k), (in_features, num_classes * 4), jnp.float32)
    b_bbox = jnp.zeros((num_classes * 4,), jnp.float32)
    cls_logits, bbox_deltas = fastrcnn_predictor(box_feats, w_cls, b_cls, w_bbox, b_bbox)

    jax.block_until_ready((feat, feat_pallas, labels, matched_gt_boxes,
                           matched_idxs_p, prop_labels,
                           cls_logits, bbox_deltas))
    print("KERNEL_OK")
</pallas_src>

<mosaic_0001>
module attributes {stable_mosaic.version = 11 : i64} {
  func.func @_matmul_kernel(%arg0: i32, %arg1: i32, %arg2: i32, %arg3: memref<128x256xbf16, #tpu.memory_space<vmem>>, %arg4: memref<256x128xbf16, #tpu.memory_space<vmem>>, %arg5: memref<128x128xf32, #tpu.memory_space<vmem>>) attributes {dimension_semantics = [#tpu.dimension_semantics<parallel>, #tpu.dimension_semantics<parallel>, #tpu.dimension_semantics<arbitrary>], iteration_bounds = array<i64: 1, 1, 1>, scalar_prefetch = 0 : i64, scratch_operands = 0 : i64, tpu.core_type = #tpu.core_type<tc>, window_params = [{transform_indices = @transform_0, window_bounds = array<i64: 128, 256>}, {transform_indices = @transform_1, window_bounds = array<i64: 256, 128>}, {transform_indices = @transform_2, window_bounds = array<i64: 128, 128>}]} {
    %c0_i32 = arith.constant 0 : i32
    %0 = arith.cmpi eq, %arg2, %c0_i32 : i32
    %1 = arith.extui %0 : i1 to i32
    %c0_i32_0 = arith.constant 0 : i32
    %2 = arith.cmpi ne, %1, %c0_i32_0 : i32
    scf.if %2 {
      %cst_8 = arith.constant 0.000000e+00 : f32
      %9 = vector.broadcast %cst_8 : f32 to vector<128x128xf32>
      %c0_9 = arith.constant 0 : index
      %c0_10 = arith.constant 0 : index
      %10 = vector.load %arg5[%c0_9, %c0_10] : memref<128x128xf32, #tpu.memory_space<vmem>>, vector<128x128xf32>
      tpu.vector_store %arg5[%c0_9, %c0_10], %9 {strides = array<i32>} : memref<128x128xf32, #tpu.memory_space<vmem>>, vector<128x128xf32>,
    } else {
    }
    %c0 = arith.constant 0 : index
    %c0_1 = arith.constant 0 : index
    %3 = vector.load %arg5[%c0, %c0_1] : memref<128x128xf32, #tpu.memory_space<vmem>>, vector<128x128xf32>
    %c0_2 = arith.constant 0 : index
    %c0_3 = arith.constant 0 : index
    %4 = vector.load %arg3[%c0_2, %c0_3] : memref<128x256xbf16, #tpu.memory_space<vmem>>, vector<128x256xbf16>
    %c0_4 = arith.constant 0 : index
    %c0_5 = arith.constant 0 : index
    %5 = vector.load %arg4[%c0_4, %c0_5] : memref<256x128xbf16, #tpu.memory_space<vmem>>, vector<256x128xbf16>
    %cst = arith.constant dense<0.000000e+00> : vector<128x128xf32>
    %6 = tpu.matmul %4, %5, %cst {dimension_numbers = #tpu.dot_dimension_numbers<[1], [0], [0], [1], [0, 0, 1, 1], [], []>} : vector<128x256xbf16>, vector<256x128xbf16>, vector<128x128xf32> -> vector<128x128xf32>
    %7 = arith.addf %3, %6 : vector<128x128xf32>
    %c0_6 = arith.constant 0 : index
    %c0_7 = arith.constant 0 : index
    %8 = vector.load %arg5[%c0_6, %c0_7] : memref<128x128xf32, #tpu.memory_space<vmem>>, vector<128x128xf32>
    tpu.vector_store %arg5[%c0_6, %c0_7], %7 {strides = array<i32>} : memref<128x128xf32, #tpu.memory_space<vmem>>, vector<128x128xf32>,
    return
  }
  func.func @transform_0(%arg0: i32, %arg1: i32, %arg2: i32) -> (i32, i32) {
    %c0_i32 = arith.constant 0 : i32
    return %arg0, %arg2 : i32, i32
  }
  func.func @transform_1(%arg0: i32, %arg1: i32, %arg2: i32) -> (i32, i32) {
    %c0_i32 = arith.constant 0 : i32
    return %arg2, %arg1 : i32, i32
  }
  func.func @transform_2(%arg0: i32, %arg1: i32, %arg2: i32) -> (i32, i32) {
    %c0_i32 = arith.constant 0 : i32
    return %arg0, %arg1 : i32, i32
  }
}

</mosaic_0001>

<llo_original>
// kernel: tpu_custom_call.1
$region0: #{tpu_custom_call.1}
  #allocation0 [shape = 'u32[]', space=smem, size = 0x4, offset = 0x4, fixed_abs, tag = 'smem constant byte address 0x4 - core index']
  #allocation1 [shape = 'u32[144,128]{1,0:T(1,128)}', space=vmem, size = 0x12000, scoped, tag = 'internal scratch']
  %s0 = inlined_call_operand.hbm [shape: bf16[128,256], index: 0, kind: input, shape index: {}]
  %s1 = inlined_call_operand.hbm [shape: bf16[256,128], index: 1, kind: input, shape index: {}]
  %s2 = inlined_call_operand.hbm [shape: f32[128,128], index: 2, kind: output, shape index: {}]
  %s3 = sld [smem:[#allocation0]]
  $region30: #{tpu_custom_call.1} parent=0
    _
  %s5 = ssub.s32 1, %s3
  %s6 = scalar_select 0, %s5, %s3
  $region1: #{tpu_custom_call.1} parent=0
    #allocation2 [shape = 'u8[65536]{0}', space=vmem, size = 0x10000, scoped, tag = 'input window, operand 0, single buffered']
    #allocation3 [shape = 's32[1]{0}', space=sflag, size = 0x4, scoped, tag = 'scoped memory for tpu_custom_call.1']
    #allocation4 [shape = 's32[1]{0}', space=sflag, size = 0x4, scoped, tag = 'scoped memory for tpu_custom_call.1']
    #allocation5 [shape = 'u8[65536]{0}', space=vmem, size = 0x10000, scoped, tag = 'input window, operand 1, single buffered']
    #allocation6 [shape = 's32[1]{0}', space=sflag, size = 0x4, scoped, tag = 'scoped memory for tpu_custom_call.1']
    #allocation7 [shape = 'u8[65536]{0}', space=vmem, size = 0x10000, scoped, tag = 'output window, operand 0, single buffered']
    %7 = vsyncpa [#allocation3], 0
    %8 = vsyncpa [#allocation6], 0
    %9 = vsyncpa [#allocation4], 0
    // Predicated region
    $region2: #{tpu_custom_call.1} parent=1 // pred_check
      _
    $region3: #{tpu_custom_call.1} parent=1 // pred_check_branch
      %11 = sbr.rel (0) target = $region5
    $region4: #{tpu_custom_call.1} parent=1 // pred_region
      %s13 = ssub.s32 2048, 2048
      %14 = vsyncadd [#allocation3], %s13
      %s15 = sshll.u32 [#allocation2], 4
      %s16 = int_to_ptr.vmem [resolvable:$true] %s15
      %21 = dma.hbm_to_vmem [thread:$0]  %s0, 2048, %s16, [#allocation3], 128, 128, 8
    $region5: #{tpu_custom_call.1} parent=1 // pred_fallthru
      _
    // Predicated region
    $region6: #{tpu_custom_call.1} parent=1 // pred_check
      _
    $region7: #{tpu_custom_call.1} parent=1 // pred_check_branch
      %23 = sbr.rel (0) target = $region9
    $region8: #{tpu_custom_call.1} parent=1 // pred_region
      %s25 = ssub.s32 2048, 2048
      %26 = vsyncadd [#allocation6], %s25
      %s27 = sshll.u32 [#allocation5], 4
      %s28 = int_to_ptr.vmem [resolvable:$true] %s27
      %33 = dma.hbm_to_vmem [thread:$0]  %s1, 2048, %s28, [#allocation6], 64, 64, 4
    $region9: #{tpu_custom_call.1} parent=1 // pred_fallthru
      _
    // Predicated region
    $region10: #{tpu_custom_call.1} parent=1 // pred_check
      _
    $region11: #{tpu_custom_call.1} parent=1 // pred_check_branch
      %35 = sbr.rel (0) target = $region13
    $region12: #{tpu_custom_call.1} parent=1 // pred_region
      %36 = dma.done [#allocation3], 2048
    $region13: #{tpu_custom_call.1} parent=1 // pred_fallthru
      _
    // Predicated region
    $region14: #{tpu_custom_call.1} parent=1 // pred_check
      _
    $region15: #{tpu_custom_call.1} parent=1 // pred_check_branch
      %38 = sbr.rel (0) target = $region17
    $region16: #{tpu_custom_call.1} parent=1 // pred_region
      %39 = dma.done [#allocation6], 2048
    $region17: #{tpu_custom_call.1} parent=1 // pred_fallthru
      _
    %p41 = scmp.eq.s32.totalorder 0, 0
    // Predicated region
    $region18: #{tpu_custom_call.1} parent=1 // pred_check
      %p42 = pneg %p41
    $region19: #{tpu_custom_call.1} parent=1 // pred_check_branch
      %44 = sbr.rel (%p42) target = $region21
    $region20: #{tpu_custom_call.1} parent=1 // pred_region
      %45 = vst [vmem:[#allocation7] sm:$0xff] 0.0
      %46 = vst [vmem:[#allocation7 + $0x8] sm:$0xff] 0.0
      %47 = vst [vmem:[#allocation7 + $0x10] sm:$0xff] 0.0
      %48 = vst [vmem:[#allocation7 + $0x18] sm:$0xff] 0.0
      %49 = vst [vmem:[#allocation7 + $0x20] sm:$0xff] 0.0
      %50 = vst [vmem:[#allocation7 + $0x28] sm:$0xff] 0.0
      %51 = vst [vmem:[#allocation7 + $0x30] sm:$0xff] 0.0
      %52 = vst [vmem:[#allocation7 + $0x38] sm:$0xff] 0.0
      %53 = vst [vmem:[#allocation7 + $0x40] sm:$0xff] 0.0
      %54 = vst [vmem:[#allocation7 + $0x48] sm:$0xff] 0.0
      %55 = vst [vmem:[#allocation7 + $0x50] sm:$0xff] 0.0
      %56 = vst [vmem:[#allocation7 + $0x58] sm:$0xff] 0.0
      %57 = vst [vmem:[#allocation7 + $0x60] sm:$0xff] 0.0
      %58 = vst [vmem:[#allocation7 + $0x68] sm:$0xff] 0.0
      %59 = vst [vmem:[#allocation7 + $0x70] sm:$0xff] 0.0
      %60 = vst [vmem:[#allocation7 + $0x78] sm:$0xff] 0.0
    $region21: #{tpu_custom_call.1} parent=1 // pred_fallthru
      _
    %v61 = vld [vmem:[#allocation7] sm:$0xff]
    %v62 = vld [vmem:[#allocation7 + $0x8] sm:$0xff]
    %v63 = vld [vmem:[#allocation7 + $0x10] sm:$0xff]
    %v64 = vld [vmem:[#allocation7 + $0x18] sm:$0xff]
    %v65 = vld [vmem:[#allocation7 + $0x20] sm:$0xff]
    %v66 = vld [vmem:[#allocation7 + $0x28] sm:$0xff]
    %v67 = vld [vmem:[#allocation7 + $0x30] sm:$0xff]
    %v68 = vld [vmem:[#allocation7 + $0x38] sm:$0xff]
    %v69 = vld [vmem:[#allocation7 + $0x40] sm:$0xff]
    %v70 = vld [vmem:[#allocation7 + $0x48] sm:$0xff]
    %v71 = vld [vmem:[#allocation7 + $0x50] sm:$0xff]
    %v72 = vld [vmem:[#allocation7 + $0x58] sm:$0xff]
    %v73 = vld [vmem:[#allocation7 + $0x60] sm:$0xff]
    %v74 = vld [vmem:[#allocation7 + $0x68] sm:$0xff]
    %v75 = vld [vmem:[#allocation7 + $0x70] sm:$0xff]
    %v76 = vld [vmem:[#allocation7 + $0x78] sm:$0xff]
    %v77 = vld [vmem:[#allocation2] sm:$0xff]
    %v78 = vld [vmem:[#allocation2 + $0x8] sm:$0xff]
    %v79 = vld [vmem:[#allocation2 + $0x10] sm:$0xff]
    %v80 = vld [vmem:[#allocation2 + $0x18] sm:$0xff]
    %v81 = vld [vmem:[#allocation2 + $0x20] sm:$0xff]
    %v82 = vld [vmem:[#allocation2 + $0x28] sm:$0xff]
    %v83 = vld [vmem:[#allocation2 + $0x30] sm:$0xff]
    %v84 = vld [vmem:[#allocation2 + $0x38] sm:$0xff]
    %v85 = vld [vmem:[#allocation2 + $0x40] sm:$0xff]
    %v86 = vld [vmem:[#allocation2 + $0x48] sm:$0xff]
    %v87 = vld [vmem:[#allocation2 + $0x50] sm:$0xff]
    %v88 = vld [vmem:[#allocation2 + $0x58] sm:$0xff]
    %v89 = vld [vmem:[#allocation2 + $0x60] sm:$0xff]
    %v90 = vld [vmem:[#allocation2 + $0x68] sm:$0xff]
    %v91 = vld [vmem:[#allocation2 + $0x70] sm:$0xff]
    %v92 = vld [vmem:[#allocation2 + $0x78] sm:$0xff]
    %v93 = vld [vmem:[#allocation5] sm:$0xf]
    %v94 = vld [vmem:[#allocation5 + $0x4] sm:$0xf]
    %v95 = vld [vmem:[#allocation5 + $0x8] sm:$0xf]
    %v96 = vld [vmem:[#allocation5 + $0xc] sm:$0xf]
    %v97 = vld [vmem:[#allocation5 + $0x10] sm:$0xf]
    %v98 = vld [vmem:[#allocation5 + $0x14] sm:$0xf]
    %v99 = vld [vmem:[#allocation5 + $0x18] sm:$0xf]
    %v100 = vld [vmem:[#allocation5 + $0x1c] sm:$0xf]
    %v101 = vld [vmem:[#allocation5 + $0x20] sm:$0xf]
    %v102 = vld [vmem:[#allocation5 + $0x24] sm:$0xf]
    %v103 = vld [vmem:[#allocation5 + $0x28] sm:$0xf]
    %v104 = vld [vmem:[#allocation5 + $0x2c] sm:$0xf]
    %v105 = vld [vmem:[#allocation5 + $0x30] sm:$0xf]
    %v106 = vld [vmem:[#allocation5 + $0x34] sm:$0xf]
    %v107 = vld [vmem:[#allocation5 + $0x38] sm:$0xf]
    %v108 = vld [vmem:[#allocation5 + $0x3c] sm:$0xf]
    %v109 = vld [vmem:[#allocation5 + $0x40] sm:$0xf]
    %v110 = vld [vmem:[#allocation5 + $0x44] sm:$0xf]
    %v111 = vld [vmem:[#allocation5 + $0x48] sm:$0xf]
    %v112 = vld [vmem:[#allocation5 + $0x4c] sm:$0xf]
    %v113 = vld [vmem:[#allocation5 + $0x50] sm:$0xf]
    %v114 = vld [vmem:[#allocation5 + $0x54] sm:$0xf]
    %v115 = vld [vmem:[#allocation5 + $0x58] sm:$0xf]
    %v116 = vld [vmem:[#allocation5 + $0x5c] sm:$0xf]
    %v117 = vld [vmem:[#allocation5 + $0x60] sm:$0xf]
    %v118 = vld [vmem:[#allocation5 + $0x64] sm:$0xf]
    %v119 = vld [vmem:[#allocation5 + $0x68] sm:$0xf]
    %v120 = vld [vmem:[#allocation5 + $0x6c] sm:$0xf]
    %v121 = vld [vmem:[#allocation5 + $0x70] sm:$0xf]
    %v122 = vld [vmem:[#allocation5 + $0x74] sm:$0xf]
    %v123 = vld [vmem:[#allocation5 + $0x78] sm:$0xf]
    %v124 = vld [vmem:[#allocation5 + $0x7c] sm:$0xf]
    %v141 = vunpack.c.l.b16 %v77
    %v142 = vunpack.c.h.b16 %v77
    %v143 = vunpack.c.l.b16 %v78
    %v144 = vunpack.c.h.b16 %v78
    %v145 = vunpack.c.l.b16 %v79
    %v146 = vunpack.c.h.b16 %v79
    %v147 = vunpack.c.l.b16 %v80
    %v148 = vunpack.c.h.b16 %v80
    %v149 = vunpack.c.l.b16 %v81
    %v150 = vunpack.c.h.b16 %v81
    %v151 = vunpack.c.l.b16 %v82
    %v152 = vunpack.c.h.b16 %v82
    %v153 = vunpack.c.l.b16 %v83
    %v154 = vunpack.c.h.b16 %v83
    %v155 = vunpack.c.l.b16 %v84
    %v156 = vunpack.c.h.b16 %v84
    %v157 = vunpack.c.l.b16 %v85
    %v158 = vunpack.c.h.b16 %v85
    %v159 = vunpack.c.l.b16 %v86
    %v160 = vunpack.c.h.b16 %v86
    %v161 = vunpack.c.l.b16 %v87
    %v162 = vunpack.c.h.b16 %v87
    %v163 = vunpack.c.l.b16 %v88
    %v164 = vunpack.c.h.b16 %v88
    %v165 = vunpack.c.l.b16 %v89
    %v166 = vunpack.c.h.b16 %v89
    %v167 = vunpack.c.l.b16 %v90
    %v168 = vunpack.c.h.b16 %v90
    %v169 = vunpack.c.l.b16 %v91
    %v170 = vunpack.c.h.b16 %v91
    %v171 = vunpack.c.l.b16 %v92
    %v172 = vunpack.c.h.b16 %v92
    %v173 = vpack.c.b16 %v143, %v141
    %v174 = vpack.c.b16 %v144, %v142
    %v175 = vpack.c.b16 %v147, %v145
    %v176 = vpack.c.b16 %v148, %v146
    %v177 = vpack.c.b16 %v151, %v149
    %v178 = vpack.c.b16 %v152, %v150
    %v179 = vpack.c.b16 %v155, %v153
    %v180 = vpack.c.b16 %v156, %v154
    %v181 = vpack.c.b16 %v159, %v157
    %v182 = vpack.c.b16 %v160, %v158
    %v183 = vpack.c.b16 %v163, %v161
    %v184 = vpack.c.b16 %v164, %v162
    %v185 = vpack.c.b16 %v167, %v165
    %v186 = vpack.c.b16 %v168, %v166
    %v187 = vpack.c.b16 %v171, %v169
    %v188 = vpack.c.b16 %v172, %v170
    %v237 = vunpack.c.l.b16 %v93
    %v238 = vunpack.c.l.b16 %v94
    %v239 = vunpack.c.l.b16 %v95
    %v240 = vunpack.c.l.b16 %v96
    %v241 = vunpack.c.l.b16 %v97
    %v242 = vunpack.c.l.b16 %v98
    %v243 = vunpack.c.l.b16 %v99
    %v244 = vunpack.c.l.b16 %v100
    %v245 = vunpack.c.l.b16 %v101
    %v246 = vunpack.c.l.b16 %v102
    %v247 = vunpack.c.l.b16 %v103
    %v248 = vunpack.c.l.b16 %v104
    %v249 = vunpack.c.l.b16 %v105
    %v250 = vunpack.c.l.b16 %v106
    %v251 = vunpack.c.l.b16 %v107
    %v252 = vunpack.c.l.b16 %v108
    %v253 = vunpack.c.l.b16 %v109
    %v254 = vunpack.c.l.b16 %v110
    %v255 = vunpack.c.l.b16 %v111
    %v256 = vunpack.c.l.b16 %v112
    %v257 = vunpack.c.l.b16 %v113
    %v258 = vunpack.c.l.b16 %v114
    %v259 = vunpack.c.l.b16 %v115
    %v260 = vunpack.c.l.b16 %v116
    %v261 = vunpack.c.l.b16 %v117
    %v262 = vunpack.c.l.b16 %v118
    %v263 = vunpack.c.l.b16 %v119
    %v264 = vunpack.c.l.b16 %v120
    %v265 = vunpack.c.l.b16 %v121
    %v266 = vunpack.c.l.b16 %v122
    %v267 = vunpack.c.l.b16 %v123
    %v268 = vunpack.c.l.b16 %v124
    %v269 = vpack.c.b16 %v238, %v237
    %v270 = vpack.c.b16 %v240, %v239
    %v271 = vpack.c.b16 %v242, %v241
    %v272 = vpack.c.b16 %v244, %v243
    %v273 = vpack.c.b16 %v246, %v245
    %v274 = vpack.c.b16 %v248, %v247
    %v275 = vpack.c.b16 %v250, %v249
    %v276 = vpack.c.b16 %v252, %v251
    %v277 = vpack.c.b16 %v254, %v253
    %v278 = vpack.c.b16 %v256, %v255
    %v279 = vpack.c.b16 %v258, %v257
    %v280 = vpack.c.b16 %v260, %v259
    %v281 = vpack.c.b16 %v262, %v261
    %v282 = vpack.c.b16 %v264, %v263
    %v283 = vpack.c.b16 %v266, %v265
    %v284 = vpack.c.b16 %v268, %v267
    %301 = vmatprep.subr.bf16.mxu0 0
    %302 = vmatpush1.bf16.msra.mxu0 %v269
    %303 = vmatprep.subr.bf16.mxu0 0
    %304 = vmatpush1.bf16.msra.mxu0 %v270
    %305 = vmatprep.subr.bf16.mxu0 0
    %306 = vmatpush1.bf16.msra.mxu0 %v271
    %307 = vmatprep.subr.bf16.mxu0 0
    %308 = vmatpush1.bf16.msra.mxu0 %v272
    %309 = vmatprep.subr.bf16.mxu0 0
    %310 = vmatpush1.bf16.msra.mxu0 %v273
    %311 = vmatprep.subr.bf16.mxu0 0
    %312 = vmatpush1.bf16.msra.mxu0 %v274
    %313 = vmatprep.subr.bf16.mxu0 0
    %314 = vmatpush1.bf16.msra.mxu0 %v275
    %315 = vmatprep.subr.bf16.mxu0 0
    %316 = vmatpush1.bf16.msra.mxu0 %v276
    %317 = vmatprep.subr.bf16.mxu0 0
    %318 = vmatpush1.bf16.msra.mxu0 %v277
    %319 = vmatprep.subr.bf16.mxu0 0
    %320 = vmatpush1.bf16.msra.mxu0 %v278
    %321 = vmatprep.subr.bf16.mxu0 0
    %322 = vmatpush1.bf16.msra.mxu0 %v279
    %323 = vmatprep.subr.bf16.mxu0 0
    %324 = vmatpush1.bf16.msra.mxu0 %v280
    %325 = vmatprep.subr.bf16.mxu0 0
    %326 = vmatpush1.bf16.msra.mxu0 %v281
    %327 = vmatprep.subr.bf16.mxu0 0
    %328 = vmatpush1.bf16.msra.mxu0 %v282
    %329 = vmatprep.subr.bf16.mxu0 0
    %330 = vmatpush1.bf16.msra.mxu0 %v283
    %331 = vmatprep.subr.bf16.mxu0 0
    %332 = vmatpush1.bf16.msra.mxu0 %v284
    %333 = vmatprep.mubr.bf16.mxu0 %v174
    %334 = vmatmul.mubr.bf16.gmra.mrb[0].mxu0 %v173
    %v335 = vpop.f32.mrb[0].mxu0
    %v336 = vadd.f32 0.0, %v335
    %v337 = vpop.f32.mrb[0].mxu0
    %v338 = vpop.f32.mrb[0].mxu0
    %v339 = vadd.f32 0.0, %v338
    %v340 = vpop.f32.mrb[0].mxu0
    %341 = vmatprep.mubr.bf16.mxu0 %v176
    %342 = vmatmul.mubr.bf16.gmra.mrb[0].mxu0 %v175
    %v343 = vpop.f32.mrb[0].mxu0
    %v344 = vadd.f32 0.0, %v343
    %v345 = vpop.f32.mrb[0].mxu0
    %v346 = vpop.f32.mrb[0].mxu0
    %v347 = vadd.f32 0.0, %v346
    %v348 = vpop.f32.mrb[0].mxu0
    %349 = vmatprep.mubr.bf16.mxu0 %v178
    %350 = vmatmul.mubr.bf16.gmra.mrb[0].mxu0 %v177
    %v351 = vpop.f32.mrb[0].mxu0
    %v352 = vadd.f32 0.0, %v351
    %v353 = vpop.f32.mrb[0].mxu0
    %v354 = vpop.f32.mrb[0].mxu0
    %v355 = vadd.f32 0.0, %v354
    %v356 = vpop.f32.mrb[0].mxu0
    %357 = vmatprep.mubr.bf16.mxu0 %v180
    %358 = vmatmul.mubr.bf16.gmra.mrb[0].mxu0 %v179
    %v359 = vpop.f32.mrb[0].mxu0
    %v360 = vadd.f32 0.0, %v359
    %v361 = vpop.f32.mrb[0].mxu0
    %v362 = vpop.f32.mrb[0].mxu0
    %v363 = vadd.f32 0.0, %v362
    %v364 = vpop.f32.mrb[0].mxu0
    %365 = vmatprep.mubr.bf16.mxu0 %v182
    %366 = vmatmul.mubr.bf16.gmra.mrb[0].mxu0 %v181
    %v367 = vpop.f32.mrb[0].mxu0
    %v368 = vadd.f32 0.0, %v367
    %v369 = vpop.f32.mrb[0].mxu0
    %v370 = vpop.f32.mrb[0].mxu0
    %v371 = vadd.f32 0.0, %v370
    %v372 = vpop.f32.mrb[0].mxu0
    %373 = vmatprep.mubr.bf16.mxu0 %v184
    %374 = vmatmul.mubr.bf16.gmra.mrb[0].mxu0 %v183
    %v375 = vpop.f32.mrb[0].mxu0
    %v376 = vadd.f32 0.0, %v375
    %v377 = vpop.f32.mrb[0].mxu0
    %v378 = vpop.f32.mrb[0].mxu0
    %v379 = vadd.f32 0.0, %v378
    %v380 = vpop.f32.mrb[0].mxu0
    %381 = vmatprep.mubr.bf16.mxu0 %v186
    %382 = vmatmul.mubr.bf16.gmra.mrb[0].mxu0 %v185
    %v383 = vpop.f32.mrb[0].mxu0
    %v384 = vadd.f32 0.0, %v383
    %v385 = vpop.f32.mrb[0].mxu0
    %v386 = vpop.f32.mrb[0].mxu0
    %v387 = vadd.f32 0.0, %v386
    %v388 = vpop.f32.mrb[0].mxu0
    %389 = vmatprep.mubr.bf16.mxu0 %v188
    %390 = vmatmul.mubr.bf16.gmra.mrb[0].mxu0 %v187
    %v391 = vpop.f32.mrb[0].mxu0
    %v392 = vadd.f32 0.0, %v391
    %v393 = vpop.f32.mrb[0].mxu0
    %v394 = vpop.f32.mrb[0].mxu0
    %v395 = vadd.f32 0.0, %v394
    %v396 = vpop.f32.mrb[0].mxu0
    %397 = vdwg.mxu0
    %v398 = vadd.f32 %v61, %v336
    %v399 = vadd.f32 %v62, %v339
    %v400 = vadd.f32 %v63, %v344
    %v401 = vadd.f32 %v64, %v347
    %v402 = vadd.f32 %v65, %v352
    %v403 = vadd.f32 %v66, %v355
    %v404 = vadd.f32 %v67, %v360
    %v405 = vadd.f32 %v68, %v363
    %v406 = vadd.f32 %v69, %v368
    %v407 = vadd.f32 %v70, %v371
    %v408 = vadd.f32 %v71, %v376
    %v409 = vadd.f32 %v72, %v379
    %v410 = vadd.f32 %v73, %v384
    %v411 = vadd.f32 %v74, %v387
    %v412 = vadd.f32 %v75, %v392
    %v413 = vadd.f32 %v76, %v395
    %414 = vst [vmem:[#allocation7] sm:$0xff] %v398
    %415 = vst [vmem:[#allocation7 + $0x8] sm:$0xff] %v399
    %416 = vst [vmem:[#allocation7 + $0x10] sm:$0xff] %v400
    %417 = vst [vmem:[#allocation7 + $0x18] sm:$0xff] %v401
    %418 = vst [vmem:[#allocation7 + $0x20] sm:$0xff] %v402
    %419 = vst [vmem:[#allocation7 + $0x28] sm:$0xff] %v403
    %420 = vst [vmem:[#allocation7 + $0x30] sm:$0xff] %v404
    %421 = vst [vmem:[#allocation7 + $0x38] sm:$0xff] %v405
    %422 = vst [vmem:[#allocation7 + $0x40] sm:$0xff] %v406
    %423 = vst [vmem:[#allocation7 + $0x48] sm:$0xff] %v407
    %424 = vst [vmem:[#allocation7 + $0x50] sm:$0xff] %v408
    %425 = vst [vmem:[#allocation7 + $0x58] sm:$0xff] %v409
    %426 = vst [vmem:[#allocation7 + $0x60] sm:$0xff] %v410
    %427 = vst [vmem:[#allocation7 + $0x68] sm:$0xff] %v411
    %428 = vst [vmem:[#allocation7 + $0x70] sm:$0xff] %v412
    %429 = vst [vmem:[#allocation7 + $0x78] sm:$0xff] %v413
    // Predicated region
    $region22: #{tpu_custom_call.1} parent=1 // pred_check
      _
    $region23: #{tpu_custom_call.1} parent=1 // pred_check_branch
      %431 = sbr.rel (0) target = $region25
    $region24: #{tpu_custom_call.1} parent=1 // pred_region
      %s433 = ssub.s32 2048, 2048
      %434 = vsyncadd [#allocation4], %s433
      %s435 = sshll.u32 [#allocation7], 4
      %s436 = int_to_ptr.vmem [resolvable:$true] %s435
      %441 = dma.vmem_to_hbm [thread:$0]  %s436, 2048, %s2, [#allocation4], 128, 128, 8
    $region25: #{tpu_custom_call.1} parent=1 // pred_fallthru
      _
    // Predicated region
    $region26: #{tpu_custom_call.1} parent=1 // pred_check
      _
    $region27: #{tpu_custom_call.1} parent=1 // pred_check_branch
      %443 = sbr.rel (0) target = $region29
    $region28: #{tpu_custom_call.1} parent=1 // pred_region
      %444 = dma.done [#allocation4], 2048
    $region29: #{tpu_custom_call.1} parent=1 // pred_fallthru
      _
    %445 = vsyncpa [#allocation3], 1
    %446 = vsyncpa [#allocation6], 1
    %447 = vsyncpa [#allocation4], 1

</llo_original>
